<compile_context>
chip_gen: v6e
topology: v6e:2x2x1
jax: 0.10.0
libtpu: 0.0.40
codegen_flags: <defaults>
</compile_context>

<pallas_src>
import functools

import jax
import jax.numpy as jnp
from jax.experimental import pallas as pl
from jax.experimental.pallas import tpu as pltpu


def _projection_kernel(x_ref, w_ref, b_ref, o_ref):
    # x_ref: (tm, d_model) bf16, w_ref: (d_model, tn) bf16, b_ref: (1, tn) f32
    acc = jnp.dot(x_ref[...], w_ref[...], preferred_element_type=jnp.float32)
    acc = acc + b_ref[...]  # fp32 bias broadcast (1, tn) over rows (VPU filler)
    o_ref[...] = acc.astype(o_ref.dtype)


def _round_up(x, m):
    return (x + m - 1) // m * m


def prepare_projection_params(w_t, b, *, tn=1024, param_dtype=jnp.bfloat16):
    """One-time parameter prep (call at init, NOT per forward).

    w_t: (d_model, vocab) == PyTorch `weight.T`;  b: (vocab,).
    Casts the weight to `param_dtype` and pads the vocab axis to a multiple of
    `tn` (when vocab > tn) so the per-call path has zero weight copies.
    """
    _, vocab = w_t.shape
    n_pad = _round_up(vocab, tn) if vocab > tn else vocab
    if n_pad != vocab:
        w_t = jnp.pad(w_t, ((0, 0), (0, n_pad - vocab)))
        b = jnp.pad(b, ((0, n_pad - vocab),))
    w_prep = jnp.asarray(w_t, dtype=param_dtype)
    b_prep = jnp.asarray(b, dtype=jnp.float32).reshape(1, n_pad)
    return w_prep, b_prep


@functools.partial(jax.jit, static_argnames=("vocab", "tm", "tn", "out_dtype"))
def projection_layer(x, w_prep, b_prep, vocab, *, tm=256, tn=1024,
                     out_dtype=None):
    """x: (..., d_model); w_prep/b_prep from prepare_projection_params.

    Returns (..., vocab) logits in `out_dtype` (default x.dtype) with fp32
    accumulation on the MXU. Note: inputs are fed to the MXU in bf16, an
    intentional precision tradeoff vs an f32 PyTorch Linear.
    """
    out_dtype = x.dtype if out_dtype is None else out_dtype
    d_model = x.shape[-1]
    n_pad = w_prep.shape[-1]
    lead_shape = x.shape[:-1]

    x2d = x.reshape(-1, d_model)
    M = x2d.shape[0]

    # Clamp tiles to array extents (full-extent blocks are always legal).
    tm_ = min(tm, M)
    tn_ = min(tn, n_pad)
    assert n_pad % tn_ == 0, (
        f"padded vocab {n_pad} must be a multiple of tn={tn_}; "
        f"prepare params with the same tn used at call time")

    # Row padding only (activations are small relative to the LM-head weight).
    m_pad = _round_up(M, tm_)
    if m_pad != M:
        x2d = jnp.pad(x2d, ((0, m_pad - M), (0, 0)))

    # Per-call casts are no-ops when callers store params/activations in bf16.
    x_in = x2d if x2d.dtype == jnp.bfloat16 else x2d.astype(jnp.bfloat16)
    w_in = w_prep if w_prep.dtype == jnp.bfloat16 else w_prep.astype(jnp.bfloat16)
    b_in = b_prep if b_prep.dtype == jnp.float32 else b_prep.astype(jnp.float32)

    grid = (n_pad // tn_, m_pad // tm_)  # vocab outer, rows inner
    out_itemsize = jnp.dtype(out_dtype).itemsize

    # Real HBM traffic: x is re-streamed once per vocab tile, W/bias once,
    # plus the (padded) output writeback.
    flops = 2 * m_pad * d_model * n_pad
    bytes_accessed = (
        m_pad * d_model * 2 * (n_pad // tn_)   # x replays (bf16)
        + d_model * n_pad * 2                  # weight, streamed once (bf16)
        + n_pad * 4                            # bias (f32)
        + m_pad * n_pad * out_itemsize         # logits writeback
    )

    # Double-buffered working set + fp32 accumulator intermediate, +25% slack.
    vmem_need = (
        2 * (tm_ * d_model * 2 + d_model * tn_ * 2 + tm_ * tn_ * out_itemsize
             + tn_ * 4)
        + tm_ * tn_ * 4
    )
    vmem_limit = int(min(max(vmem_need * 5 // 4, 16 * 1024 * 1024),
                         112 * 1024 * 1024))

    out = pl.pallas_call(
        _projection_kernel,
        out_shape=jax.ShapeDtypeStruct((m_pad, n_pad), out_dtype),
        grid_spec=pltpu.PrefetchScalarGridSpec(
            num_scalar_prefetch=0,
            grid=grid,
            in_specs=[
                pl.BlockSpec((tm_, d_model), lambda j, i: (i, 0)),   # x rows
                pl.BlockSpec((d_model, tn_), lambda j, i: (0, j)),   # W tile
                pl.BlockSpec((1, tn_), lambda j, i: (0, j)),         # bias
            ],
            out_specs=pl.BlockSpec((tm_, tn_), lambda j, i: (i, j)),
        ),
        compiler_params=pltpu.CompilerParams(
            dimension_semantics=("parallel", "parallel"),
            vmem_limit_bytes=vmem_limit,
        ),
        cost_estimate=pl.CostEstimate(
            flops=flops, transcendentals=0, bytes_accessed=bytes_accessed
        ),
    )(x_in, w_in, b_in)

    # Static-shape slice: elided entirely when no padding was required
    # (choose tn | vocab and M a multiple of tm to hit this path).
    if m_pad != M or n_pad != vocab:
        out = out[:M, :vocab]
    return out.reshape(*lead_shape, vocab)


if __name__ == "__main__":
    # Small shapes consistent with the module: (batch, seq, d_model) -> (batch, seq, vocab)
    batch, seq, d_model, vocab_size = 2, 8, 32, 64

    key = jax.random.PRNGKey(0)
    kx, kw, kb = jax.random.split(key, 3)

    x = jax.random.normal(kx, (batch, seq, d_model), dtype=jnp.float32)

    # Deterministic init mimicking torch.nn.Linear's uniform(-1/sqrt(d), 1/sqrt(d)).
    bound = 1.0 / (d_model ** 0.5)
    w = jax.random.uniform(kw, (vocab_size, d_model), minval=-bound, maxval=bound,
                           dtype=jnp.float32)  # PyTorch layout (out, in)
    b = jax.random.uniform(kb, (vocab_size,), minval=-bound, maxval=bound,
                           dtype=jnp.float32)

    w_t = jnp.asarray(w.T)  # (d_model, vocab)

    # One-time param prep: bf16 cast + vocab padding happen here, not per call.
    w_prep, b_prep = prepare_projection_params(w_t, b, tn=1024)

    y = projection_layer(x, w_prep, b_prep, vocab_size)
    jax.block_until_ready(y)

    # Reference: plain fp32 JAX Linear forward. Kernel feeds bf16 to the MXU
    # (fp32 accumulation), so allow bf16-level tolerance.
    y_ref = x @ w_t + b
    assert y.shape == (batch, seq, vocab_size)
    assert jnp.allclose(y, y_ref, atol=5e-2, rtol=5e-2), (
        float(jnp.max(jnp.abs(y - y_ref)))
    )

    print("KERNEL_OK")
</pallas_src>

<mosaic_0001>
module attributes {stable_mosaic.version = 11 : i64} {
  func.func @_projection_kernel(%arg0: i32, %arg1: i32, %arg2: memref<16x32xbf16, #tpu.memory_space<vmem>>, %arg3: memref<32x64xbf16, #tpu.memory_space<vmem>>, %arg4: memref<1x64xf32, #tpu.memory_space<vmem>>, %arg5: memref<16x64xf32, #tpu.memory_space<vmem>>) attributes {dimension_semantics = [#tpu.dimension_semantics<parallel>, #tpu.dimension_semantics<parallel>], iteration_bounds = array<i64: 1, 1>, scalar_prefetch = 0 : i64, scratch_operands = 0 : i64, tpu.core_type = #tpu.core_type<tc>, window_params = [{transform_indices = @transform_0, window_bounds = array<i64: 16, 32>}, {transform_indices = @transform_1, window_bounds = array<i64: 32, 64>}, {transform_indices = @transform_2, window_bounds = array<i64: 1, 64>}, {transform_indices = @transform_3, window_bounds = array<i64: 16, 64>}]} {
    %c0 = arith.constant 0 : index
    %c0_0 = arith.constant 0 : index
    %0 = vector.load %arg2[%c0, %c0_0] : memref<16x32xbf16, #tpu.memory_space<vmem>>, vector<16x32xbf16>
    %c0_1 = arith.constant 0 : index
    %c0_2 = arith.constant 0 : index
    %1 = vector.load %arg3[%c0_1, %c0_2] : memref<32x64xbf16, #tpu.memory_space<vmem>>, vector<32x64xbf16>
    %cst = arith.constant dense<0.000000e+00> : vector<16x64xf32>
    %2 = tpu.matmul %0, %1, %cst {dimension_numbers = #tpu.dot_dimension_numbers<[1], [0], [0], [1], [0, 0, 1, 1], [], []>} : vector<16x32xbf16>, vector<32x64xbf16>, vector<16x64xf32> -> vector<16x64xf32>
    %c0_3 = arith.constant 0 : index
    %c0_4 = arith.constant 0 : index
    %3 = vector.load %arg4[%c0_3, %c0_4] : memref<1x64xf32, #tpu.memory_space<vmem>>, vector<1x64xf32>
    %4 = vector.broadcast %3 : vector<1x64xf32> to vector<16x64xf32>
    %5 = arith.addf %2, %4 : vector<16x64xf32>
    %c0_5 = arith.constant 0 : index
    %c0_6 = arith.constant 0 : index
    %6 = vector.load %arg5[%c0_5, %c0_6] : memref<16x64xf32, #tpu.memory_space<vmem>>, vector<16x64xf32>
    tpu.vector_store %arg5[%c0_5, %c0_6], %5 {strides = array<i32>} : memref<16x64xf32, #tpu.memory_space<vmem>>, vector<16x64xf32>,
    return
  }
  func.func @transform_0(%arg0: i32, %arg1: i32) -> (i32, i32) {
    %c0_i32 = arith.constant 0 : i32
    %c0_i32_0 = arith.constant 0 : i32
    return %arg1, %c0_i32 : i32, i32
  }
  func.func @transform_1(%arg0: i32, %arg1: i32) -> (i32, i32) {
    %c0_i32 = arith.constant 0 : i32
    %c0_i32_0 = arith.constant 0 : i32
    return %c0_i32, %arg0 : i32, i32
  }
  func.func @transform_2(%arg0: i32, %arg1: i32) -> (i32, i32) {
    %c0_i32 = arith.constant 0 : i32
    %c0_i32_0 = arith.constant 0 : i32
    return %c0_i32, %arg0 : i32, i32
  }
  func.func @transform_3(%arg0: i32, %arg1: i32) -> (i32, i32) {
    %c0_i32 = arith.constant 0 : i32
    return %arg1, %arg0 : i32, i32
  }
}

</mosaic_0001>

<llo_original>
// kernel: projection_layer.1
$region0: #{projection_layer.1}
  #allocation0 [shape = 'u32[]', space=smem, size = 0x4, offset = 0x4, fixed_abs, tag = 'smem constant byte address 0x4 - core index']
  #allocation1 [shape = 'u32[144,128]{1,0:T(1,128)}', space=vmem, size = 0x12000, scoped, tag = 'internal scratch']
  %s0 = inlined_call_operand.vmem [shape: bf16[16,32], index: 0, kind: input, shape index: {}]
  %s1 = inlined_call_operand.vmem [shape: bf16[32,64], index: 1, kind: input, shape index: {}]
  %s2 = inlined_call_operand.vmem [shape: f32[1,64], index: 2, kind: input, shape index: {}]
  %s3 = inlined_call_operand.hbm [shape: f32[16,64], index: 3, kind: output, shape index: {}]
  %s4 = sld [smem:[#allocation0]]
  $region22: #{projection_layer.1} parent=0
    _
  %s6 = ssub.s32 1, %s4
  %s7 = scalar_select 0, %s6, %s4
  $region1: #{projection_layer.1} parent=0
    #allocation2 [shape = 'u8[8192]{0}', space=vmem, size = 0x2000, scoped, tag = 'output window, operand 0, single buffered']
    #allocation3 [shape = 's32[1]{0}', space=sflag, size = 0x4, scoped, tag = 'scoped memory for projection_layer.1']
    %8 = vsyncpa [#allocation3], 0
    // Predicated region
    $region2: #{projection_layer.1} parent=1 // pred_check
      _
    $region3: #{projection_layer.1} parent=1 // pred_check_branch
      %10 = sbr.rel (0) target = $region5
    $region4: #{projection_layer.1} parent=1 // pred_region
      _
    $region5: #{projection_layer.1} parent=1 // pred_fallthru
      _
    // Predicated region
    $region6: #{projection_layer.1} parent=1 // pred_check
      _
    $region7: #{projection_layer.1} parent=1 // pred_check_branch
      %12 = sbr.rel (0) target = $region9
    $region8: #{projection_layer.1} parent=1 // pred_region
      _
    $region9: #{projection_layer.1} parent=1 // pred_fallthru
      _
    // Predicated region
    $region10: #{projection_layer.1} parent=1 // pred_check
      _
    $region11: #{projection_layer.1} parent=1 // pred_check_branch
      %14 = sbr.rel (0) target = $region13
    $region12: #{projection_layer.1} parent=1 // pred_region
      _
    $region13: #{projection_layer.1} parent=1 // pred_fallthru
      _
    %v16 = vld [vmem:[%s0] sm:$0xf]
    %v17 = vld [vmem:[%s0 + $0x4] sm:$0xf]
    %v18 = vld [vmem:[%s1] sm:$0xf]
    %v19 = vld [vmem:[%s1 + $0x4] sm:$0xf]
    %v20 = vld [vmem:[%s1 + $0x8] sm:$0xf]
    %v21 = vld [vmem:[%s1 + $0xc] sm:$0xf]
    %v22 = vld [vmem:[%s2] sm:$0x1]
    %v24 = vlaneseq
    %v25 = vshrl.u32 %v24, 7
    %v26 = vsub.s32 0, %v25
    %v27 = vrot.slane %v22, %v26
    %v31 = vunpack.c.l.b16 %v16
    %v32 = vunpack.c.l.b16 %v17
    %v33 = vpack.c.b16 %v32, %v31
    %v38 = vunpack.c.l.b16 %v18
    %v39 = vunpack.c.l.b16 %v19
    %v40 = vunpack.c.l.b16 %v20
    %v41 = vunpack.c.l.b16 %v21
    %v42 = vpack.c.b16 %v39, %v38
    %v43 = vpack.c.b16 %v41, %v40
    %vm46 = vcmask 261120
    %v48 = vsel %vm46, %v33, 0
    %50 = vmatprep.subr.bf16.mxu0 0
    %51 = vmatpush1.bf16.msra.mxu0 0
    %52 = vmatprep.subr.bf16.mxu0 0
    %53 = vmatpush1.bf16.msra.mxu0 0
    %54 = vmatprep.subr.bf16.mxu0 0
    %55 = vmatpush1.bf16.msra.mxu0 0
    %56 = vmatprep.subr.bf16.mxu0 0
    %57 = vmatpush1.bf16.msra.mxu0 0
    %58 = vmatprep.subr.bf16.mxu0 0
    %59 = vmatpush1.bf16.msra.mxu0 0
    %60 = vmatprep.subr.bf16.mxu0 0
    %61 = vmatpush1.bf16.msra.mxu0 0
    %62 = vmatprep.subr.bf16.mxu0 0
    %63 = vmatpush1.bf16.msra.mxu0 %v43
    %64 = vmatprep.subr.bf16.mxu0 0
    %65 = vmatpush1.bf16.msra.mxu0 %v42
    %66 = vmatprep.subr.bf16.mxu0 0
    %67 = vmatpush2.bf16.msra.mxu0 0
    %68 = vmatprep.subr.bf16.mxu0 0
    %69 = vmatpush2.bf16.msra.mxu0 0
    %70 = vmatprep.subr.bf16.mxu0 0
    %71 = vmatpush2.bf16.msra.mxu0 0
    %72 = vmatprep.subr.bf16.mxu0 0
    %73 = vmatpush2.bf16.msra.mxu0 0
    %74 = vmatprep.subr.bf16.mxu0 0
    %75 = vmatpush2.bf16.msra.mxu0 0
    %76 = vmatprep.subr.bf16.mxu0 0
    %77 = vmatpush2.bf16.msra.mxu0 0
    %78 = vmatprep.subr.bf16.mxu0 0
    %79 = vmatpush2.bf16.msra.mxu0 0
    %80 = vmatprep.subr.bf16.mxu0 0
    %81 = vmatpush2.bf16.msra.mxu0 0
    %82 = vmatprep.mubr.bf16.mxu0 0
    %83 = vmatmul.mubr.bf16.gmra.mxu0 %v48
    %v84 = vpop.f32.mrf.mxu0
    %v85 = vadd.f32 %v27, %v84
    %v86 = vpop.f32.mrf.mxu0
    %v87 = vpop.f32.mrf.mxu0
    %v88 = vadd.f32 %v27, %v87
    %v89 = vpop.f32.mrf.mxu0
    %90 = vdwg.mxu0
    %vm91 = vcmask 523264
    %92 = vst.msk [vmem:[#allocation2] sm:$0xff] %vm91, %v85
    %93 = vst.msk [vmem:[#allocation2 + $0x8] sm:$0xff] %vm91, %v88
    // Predicated region
    $region14: #{projection_layer.1} parent=1 // pred_check
      _
    $region15: #{projection_layer.1} parent=1 // pred_check_branch
      %95 = sbr.rel (0) target = $region17
    $region16: #{projection_layer.1} parent=1 // pred_region
      %s97 = ssub.s32 256, 256
      %98 = vsyncadd [#allocation3], %s97
      %s99 = sshll.u32 [#allocation2], 4
      %s100 = int_to_ptr.vmem [resolvable:$true] %s99
      %105 = dma.vmem_to_hbm [thread:$0]  %s100, 256, %s3, [#allocation3], 128, 128, 8
    $region17: #{projection_layer.1} parent=1 // pred_fallthru
      _
    // Predicated region
    $region18: #{projection_layer.1} parent=1 // pred_check
      _
    $region19: #{projection_layer.1} parent=1 // pred_check_branch
      %107 = sbr.rel (0) target = $region21
    $region20: #{projection_layer.1} parent=1 // pred_region
      %108 = dma.done [#allocation3], 256
    $region21: #{projection_layer.1} parent=1 // pred_fallthru
      _
    %109 = vsyncpa [#allocation3], 1

</llo_original>
